<compile_context>
chip_gen: v5e
topology: v5e:2x2
jax: 0.10.0
libtpu: 0.0.40
codegen_flags: <defaults>
</compile_context>

<pallas_src>
import functools

import jax
import jax.numpy as jnp
from jax.experimental import pallas as pl
from jax.experimental.pallas import tpu as pltpu


def _selector_kernel(w_ref, b_ref, x_ref, logits_ref, denom_ref):
    """Per (batch, token-tile) kernel, all lane-dense.

    w_ref      : (K, C)        classifier weight (nn.Linear out x in layout)
    b_ref      : (K, 1)        classifier bias
    x_ref      : (1, C, TS)    tokens for this tile, channels on sublanes
    logits_ref : (1, K, TS)    output logits^T (classes on sublanes)
    denom_ref  : (1, 1, TS)    output softmax denominator per token
                               (max softmax prob == 1/denom)
    """
    lt = jnp.dot(w_ref[...], x_ref[0],
                 preferred_element_type=jnp.float32)          # (K, TS) on MXU
    lt = lt + b_ref[...]                                      # bias broadcast over lanes

    m = jnp.max(lt, axis=0, keepdims=True)                    # (1, TS) sublane reduce
    denom = jnp.sum(jnp.exp(lt - m), axis=0, keepdims=True)   # (1, TS)

    logits_ref[0] = lt.astype(logits_ref.dtype)
    denom_ref[0] = denom


def _pick_tile(s):
    """Largest lane-dense tile that divides S; fall back to full S."""
    for t in (512, 256, 128):
        if s % t == 0:
            return t
    return s


def _run_selector_kernel(x_cs, weight, bias):
    """x_cs: (N, C, S) f32, weight: (K, C), bias: (K,). Returns (N,K,S), (N,1,S)."""
    N, C, S = x_cs.shape
    K = weight.shape[0]
    TS = _pick_tile(S)
    b = bias.reshape(K, 1)

    logits_t, denom = pl.pallas_call(
        _selector_kernel,
        out_shape=(
            jax.ShapeDtypeStruct((N, K, S), jnp.float32),
            jax.ShapeDtypeStruct((N, 1, S), jnp.float32),
        ),
        grid_spec=pltpu.PrefetchScalarGridSpec(
            num_scalar_prefetch=0,
            grid=(N, S // TS),
            in_specs=[
                pl.BlockSpec((K, C), lambda i, j: (0, 0)),        # weight
                pl.BlockSpec((K, 1), lambda i, j: (0, 0)),        # bias
                pl.BlockSpec((1, C, TS), lambda i, j: (i, 0, j)),  # x tokens
            ],
            out_specs=[
                pl.BlockSpec((1, K, TS), lambda i, j: (i, 0, j)),  # logits^T
                pl.BlockSpec((1, 1, TS), lambda i, j: (i, 0, j)),  # denom
            ],
        ),
        compiler_params=pltpu.CompilerParams(
            dimension_semantics=("parallel", "parallel")),
    )(weight, b, x_cs)
    return logits_t, denom


def weakly_selector_forward(x_nchw, weight, bias, num_select):
    """Replicates WeaklySelector.forward.

    x_nchw : (N, C, H, W) float32
    weight : (K, C)   (PyTorch nn.Linear weight layout: out x in)
    bias   : (K,)
    Returns (selections, preds_1, preds_0) with shapes
        (N, num_select, C), (N, num_select, K), (N, S - num_select, K).
    """
    N, C, H, W = x_nchw.shape
    S = H * W
    # Free reshape (no transpose): tokens stay channel-major for the kernel.
    x_cs = x_nchw.reshape(N, C, S)

    logits_t, denom = _run_selector_kernel(x_cs, weight, bias)
    denom = denom[:, 0, :]                           # (N, S)

    # max softmax prob = 1/denom, so "descending confidence" == ascending denom.
    # TODO(synk): descending sort / top-k ranking has no clean Pallas TPU
    # equivalent; done in plain JAX (argsort + take_along_axis).
    order = jnp.argsort(denom, axis=-1)              # (N, S)
    sel_idx = order[:, :num_select]                  # (N, num_select)
    nsel_idx = order[:, num_select:]                 # (N, S - num_select)

    selections = jnp.transpose(
        jnp.take_along_axis(x_cs, sel_idx[:, None, :], axis=2), (0, 2, 1))
    preds_1 = jnp.transpose(
        jnp.take_along_axis(logits_t, sel_idx[:, None, :], axis=2), (0, 2, 1))
    preds_0 = jnp.transpose(
        jnp.take_along_axis(logits_t, nsel_idx[:, None, :], axis=2), (0, 2, 1))
    return selections, preds_1, preds_0


def _reference_forward(x_nchw, weight, bias, num_select):
    """Pure-JAX reference mirroring the PyTorch forward (for verification)."""
    N, C, H, W = x_nchw.shape
    x_tokens = jnp.transpose(x_nchw.reshape(N, C, H * W), (0, 2, 1))
    logits = x_tokens @ weight.T + bias
    probs = jax.nn.softmax(logits, axis=-1)
    scores = jnp.max(probs, axis=-1)
    order = jnp.argsort(-scores, axis=-1)
    sel_idx = order[:, :num_select]
    nsel_idx = order[:, num_select:]
    selections = jnp.take_along_axis(x_tokens, sel_idx[..., None], axis=1)
    preds_1 = jnp.take_along_axis(logits, sel_idx[..., None], axis=1)
    preds_0 = jnp.take_along_axis(logits, nsel_idx[..., None], axis=1)
    return selections, preds_1, preds_0


if __name__ == "__main__":
    # Small shapes consistent with the module's forward (S = H*W lane-dense).
    N, C, H, W = 2, 32, 16, 16        # in_channels = 32, S = 256
    num_classes = 16
    num_select = 64                    # top-64 tokens selected per image

    key = jax.random.PRNGKey(0)
    kx, kw, kb = jax.random.split(key, 3)

    x = jax.random.normal(kx, (N, C, H, W), dtype=jnp.float32)
    # nn.Linear-style params (out_features x in_features).
    weight = jax.random.normal(kw, (num_classes, C), dtype=jnp.float32) * 0.05
    bias = jax.random.normal(kb, (num_classes,), dtype=jnp.float32) * 0.01

    fwd = jax.jit(functools.partial(weakly_selector_forward,
                                    num_select=num_select))
    selections, preds_1, preds_0 = fwd(x, weight, bias)
    jax.block_until_ready((selections, preds_1, preds_0))

    # Sanity check against pure-JAX reference.
    ref_sel, ref_p1, ref_p0 = _reference_forward(x, weight, bias, num_select)
    assert selections.shape == (N, num_select, C)
    assert preds_1.shape == (N, num_select, num_classes)
    assert preds_0.shape == (N, H * W - num_select, num_classes)
    assert jnp.allclose(selections, ref_sel, atol=1e-5)
    assert jnp.allclose(preds_1, ref_p1, atol=1e-4)
    assert jnp.allclose(preds_0, ref_p0, atol=1e-4)

    print("KERNEL_OK")
</pallas_src>

<mosaic_0001>
module attributes {stable_mosaic.version = 11 : i64} {
  func.func @_selector_kernel(%arg0: i32, %arg1: i32, %arg2: memref<16x32xf32, #tpu.memory_space<vmem>>, %arg3: memref<16x1xf32, #tpu.memory_space<vmem>>, %arg4: memref<1x32x256xf32, #tpu.memory_space<vmem>>, %arg5: memref<1x16x256xf32, #tpu.memory_space<vmem>>, %arg6: memref<1x1x256xf32, #tpu.memory_space<vmem>>) attributes {dimension_semantics = [#tpu.dimension_semantics<parallel>, #tpu.dimension_semantics<parallel>], iteration_bounds = array<i64: 2, 1>, scalar_prefetch = 0 : i64, scratch_operands = 0 : i64, tpu.core_type = #tpu.core_type<tc>, window_params = [{pipeline_mode = #tpu.pipeline_mode<synchronous>, transform_indices = @transform_0, window_bounds = array<i64: 16, 32>}, {pipeline_mode = #tpu.pipeline_mode<synchronous>, transform_indices = @transform_1, window_bounds = array<i64: 16, 1>}, {transform_indices = @transform_2, window_bounds = array<i64: 1, 32, 256>}, {transform_indices = @transform_3, window_bounds = array<i64: 1, 16, 256>}, {transform_indices = @transform_4, window_bounds = array<i64: 1, 1, 256>}]} {
    %c0 = arith.constant 0 : index
    %c0_0 = arith.constant 0 : index
    %0 = vector.load %arg2[%c0, %c0_0] : memref<16x32xf32, #tpu.memory_space<vmem>>, vector<16x32xf32>
    %c0_1 = arith.constant 0 : index
    %c0_2 = arith.constant 0 : index
    %c0_3 = arith.constant 0 : index
    %1 = vector.load %arg4[%c0_1, %c0_2, %c0_3] : memref<1x32x256xf32, #tpu.memory_space<vmem>>, vector<1x32x256xf32>
    %2 = vector.shape_cast %1 : vector<1x32x256xf32> to vector<32x256xf32>
    %cst = arith.constant dense<0.000000e+00> : vector<16x256xf32>
    %3 = tpu.matmul %0, %2, %cst {dimension_numbers = #tpu.dot_dimension_numbers<[1], [0], [0], [1], [0, 0, 1, 1], [], []>} : vector<16x32xf32>, vector<32x256xf32>, vector<16x256xf32> -> vector<16x256xf32>
    %c0_4 = arith.constant 0 : index
    %c0_5 = arith.constant 0 : index
    %4 = vector.load %arg3[%c0_4, %c0_5] : memref<16x1xf32, #tpu.memory_space<vmem>>, vector<16x1xf32>
    %5 = vector.broadcast %4 : vector<16x1xf32> to vector<16x256xf32>
    %6 = arith.addf %3, %5 : vector<16x256xf32>
    %cst_6 = arith.constant dense<0xFF800000> : vector<256xf32>
    %7 = vector.multi_reduction <maximumf>, %6, %cst_6 [0] : vector<16x256xf32> to vector<256xf32>
    %8 = vector.shape_cast %7 : vector<256xf32> to vector<1x256xf32>
    %9 = vector.broadcast %8 : vector<1x256xf32> to vector<16x256xf32>
    %10 = arith.subf %6, %9 : vector<16x256xf32>
    %11 = math.exp %10 : vector<16x256xf32>
    %cst_7 = arith.constant dense<0.000000e+00> : vector<256xf32>
    %12 = vector.multi_reduction <add>, %11, %cst_7 [0] : vector<16x256xf32> to vector<256xf32>
    %13 = vector.shape_cast %12 : vector<256xf32> to vector<1x256xf32>
    %c0_8 = arith.constant 0 : index
    %c0_9 = arith.constant 0 : index
    %c0_10 = arith.constant 0 : index
    %14 = vector.load %arg5[%c0_8, %c0_9, %c0_10] : memref<1x16x256xf32, #tpu.memory_space<vmem>>, vector<1x16x256xf32>
    %15 = vector.shape_cast %14 : vector<1x16x256xf32> to vector<16x256xf32>
    %16 = vector.shape_cast %6 : vector<16x256xf32> to vector<1x16x256xf32>
    tpu.vector_store %arg5[%c0_8, %c0_9, %c0_10], %16 {strides = array<i32>} : memref<1x16x256xf32, #tpu.memory_space<vmem>>, vector<1x16x256xf32>,
    %c0_11 = arith.constant 0 : index
    %c0_12 = arith.constant 0 : index
    %c0_13 = arith.constant 0 : index
    %17 = vector.load %arg6[%c0_11, %c0_12, %c0_13] : memref<1x1x256xf32, #tpu.memory_space<vmem>>, vector<1x1x256xf32>
    %18 = vector.shape_cast %17 : vector<1x1x256xf32> to vector<1x256xf32>
    %19 = vector.shape_cast %13 : vector<1x256xf32> to vector<1x1x256xf32>
    tpu.vector_store %arg6[%c0_11, %c0_12, %c0_13], %19 {strides = array<i32>} : memref<1x1x256xf32, #tpu.memory_space<vmem>>, vector<1x1x256xf32>,
    return
  }
  func.func @transform_0(%arg0: i32, %arg1: i32) -> (i32, i32) {
    %c0_i32 = arith.constant 0 : i32
    %c0_i32_0 = arith.constant 0 : i32
    %c0_i32_1 = arith.constant 0 : i32
    return %c0_i32, %c0_i32_0 : i32, i32
  }
  func.func @transform_1(%arg0: i32, %arg1: i32) -> (i32, i32) {
    %c0_i32 = arith.constant 0 : i32
    %c0_i32_0 = arith.constant 0 : i32
    %c0_i32_1 = arith.constant 0 : i32
    return %c0_i32, %c0_i32_0 : i32, i32
  }
  func.func @transform_2(%arg0: i32, %arg1: i32) -> (i32, i32, i32) {
    %c0_i32 = arith.constant 0 : i32
    %c0_i32_0 = arith.constant 0 : i32
    return %arg0, %c0_i32, %arg1 : i32, i32, i32
  }
  func.func @transform_3(%arg0: i32, %arg1: i32) -> (i32, i32, i32) {
    %c0_i32 = arith.constant 0 : i32
    %c0_i32_0 = arith.constant 0 : i32
    return %arg0, %c0_i32, %arg1 : i32, i32, i32
  }
  func.func @transform_4(%arg0: i32, %arg1: i32) -> (i32, i32, i32) {
    %c0_i32 = arith.constant 0 : i32
    %c0_i32_0 = arith.constant 0 : i32
    return %arg0, %c0_i32, %arg1 : i32, i32, i32
  }
}

</mosaic_0001>

<llo_original>
// kernel: weakly_selector_forward.1
$region0: #{weakly_selector_forward.1}
  #allocation0 [shape = 'u32[]', space=smem, size = 0x4, offset = 0x4, fixed_abs, tag = 'smem constant byte address 0x4 - core index']
  #allocation1 [shape = 'u32[72,128]{1,0:T(1,128)}', space=vmem, size = 0x9000, scoped, tag = 'internal scratch']
  %s0 = inlined_call_operand.vmem [shape: f32[16,32], index: 0, kind: input, shape index: {}]
  %s1 = inlined_call_operand.vmem [shape: f32[16,1], index: 1, kind: input, shape index: {}]
  %s2 = inlined_call_operand.vmem [shape: f32[2,32,256], index: 2, kind: input, shape index: {}]
  %s3 = inlined_call_operand.vmem [shape: f32[2,16,256], index: 3, kind: output, shape index: {0}]
  %s4 = inlined_call_operand.vmem [shape: f32[2,1,256], index: 4, kind: output, shape index: {1}]
  %5 = xla_tuple %s3, %s4
  %s6 = sld [smem:[#allocation0]]
  $region53: #{weakly_selector_forward.1} parent=0
    _
  %s8 = ssub.s32 1, %s6
  %s9 = scalar_select 0, %s8, %s6
  loop: start=0, step=1, limit=4
  $region2: #{weakly_selector_forward.1} parent=0 // loop_pre_header
    _
  $region3: #{weakly_selector_forward.1} parent=0 // loop_header
    %s11 = sphi 0, %s15
    %p12 = scmp.ge.s32.totalorder %s11, 4
    %s18 = sphi 0, %s30
    %s19 = sphi 0, %s26
    %s20 = sphi 0, %s18
    %s21 = sphi 0, %s19
    %s22 = sphi 0, %s20
    %s23 = sphi 0, %s21
    %s31 = sphi 0, %s31
    %s33 = sphi 0, %s31
    %s34 = sphi 0, %s33
    %s48 = sphi 0, %s34
    %s52 = sphi 0, %s52
    %s54 = sphi 0, %s52
    %s55 = sphi 0, %s54
    %s69 = sphi 0, %s55
    %s77 = sphi 0, %s79
    %s80 = sphi 0, %s77
    %s81 = sphi 0, %s80
    %s97 = sphi 0, %s81
    %s105 = sphi 0, %s107
    %s108 = sphi 0, %s105
    %s109 = sphi 0, %s108
    %s125 = sphi 0, %s109
    %s133 = sphi 0, %s135
    %s136 = sphi 0, %s133
    %s137 = sphi 0, %s136
    %s153 = sphi 0, %s137
  $region4: #{weakly_selector_forward.1} parent=0 // loop_header_branch
    %14 = sbr.rel (%p12) target = $region8
  $region5: #{weakly_selector_forward.1} parent=0 // loop_body
    %s16 = ssub.s32 %s11, 1
    %s17 = ssub.s32 %s11, 2
    %s24 = sadd.s32 1, %s19
    %p25 = scmp.ge.s32.totalorder %s24, 1
    %s26 = scalar_select %p25, 0, %s24
    %s27 = sadd.s32 1, %s18
    %s28 = scalar_select %p25, %s27, %s18
    %p29 = scmp.ge.s32.totalorder %s28, 2
    %s30 = scalar_select %p29, 0, %s28
    %s32 = sadd.s32 %s31, 1
    %p35 = scmp.eq.s32.totalorder %s11, 1
    %p36 = scmp.ne.s32.totalorder %s31, %s33
    %p37 = scmp.eq.s32.totalorder %s11, 0
    %p38 = por %p36, %p37
    %p39 = scmp.ne.s32.totalorder %s31, %s33
    %p40 = scmp.eq.s32.totalorder %s16, 1
    %p41 = por %p39, %p40
    %p42 = scmp.ne.s32.totalorder %s33, %s34
    %p43 = scmp.eq.s32.totalorder %s16, 0
    %p44 = por %p42, %p43
    %p45 = scmp.ne.s32.totalorder %s33, %s34
    %p46 = scmp.eq.s32.totalorder %s17, 1
    %p47 = por %p45, %p46
    %p49 = scmp.ne.s32.totalorder %s34, %s48
    %p50 = scmp.eq.s32.totalorder %s17, 0
    %p51 = por %p49, %p50
    %s53 = sadd.s32 %s52, 1
    %p56 = scmp.eq.s32.totalorder %s11, 1
    %p57 = scmp.ne.s32.totalorder %s52, %s54
    %p58 = scmp.eq.s32.totalorder %s11, 0
    %p59 = por %p57, %p58
    %p60 = scmp.ne.s32.totalorder %s52, %s54
    %p61 = scmp.eq.s32.totalorder %s16, 1
    %p62 = por %p60, %p61
    %p63 = scmp.ne.s32.totalorder %s54, %s55
    %p64 = scmp.eq.s32.totalorder %s16, 0
    %p65 = por %p63, %p64
    %p66 = scmp.ne.s32.totalorder %s54, %s55
    %p67 = scmp.eq.s32.totalorder %s17, 1
    %p68 = por %p66, %p67
    %p70 = scmp.ne.s32.totalorder %s55, %s69
    %p71 = scmp.eq.s32.totalorder %s17, 0
    %p72 = por %p70, %p71
    %s73 = ssub.s32 %s18, %s30
    %s74 = ssub.s32 %s19, %s26
    %s75 = sor.u32 %s73, %s74
    %p76 = scmp.eq.s32.totalorder %s75, 0
    %s78 = sadd.s32 %s77, 1
    %s79 = scalar_select %p76, %s77, %s78
    %p82 = pneg %p76
    %p83 = scmp.eq.s32.totalorder %s11, 1
    %p84 = por %p82, %p83
    %p85 = scmp.ne.s32.totalorder %s77, %s80
    %p86 = scmp.eq.s32.totalorder %s11, 0
    %p87 = por %p85, %p86
    %p88 = scmp.ne.s32.totalorder %s77, %s80
    %p89 = scmp.eq.s32.totalorder %s16, 1
    %p90 = por %p88, %p89
    %p91 = scmp.ne.s32.totalorder %s80, %s81
    %p92 = scmp.eq.s32.totalorder %s16, 0
    %p93 = por %p91, %p92
    %p94 = scmp.ne.s32.totalorder %s80, %s81
    %p95 = scmp.eq.s32.totalorder %s17, 1
    %p96 = por %p94, %p95
    %p98 = scmp.ne.s32.totalorder %s81, %s97
    %p99 = scmp.eq.s32.totalorder %s17, 0
    %p100 = por %p98, %p99
    %s101 = ssub.s32 %s18, %s30
    %s102 = ssub.s32 %s19, %s26
    %s103 = sor.u32 %s101, %s102
    %p104 = scmp.eq.s32.totalorder %s103, 0
    %s106 = sadd.s32 %s105, 1
    %s107 = scalar_select %p104, %s105, %s106
    %p110 = pneg %p104
    %p111 = scmp.eq.s32.totalorder %s11, 1
    %p112 = por %p110, %p111
    %p113 = scmp.ne.s32.totalorder %s105, %s108
    %p114 = scmp.eq.s32.totalorder %s11, 0
    %p115 = por %p113, %p114
    %p116 = scmp.ne.s32.totalorder %s105, %s108
    %p117 = scmp.eq.s32.totalorder %s16, 1
    %p118 = por %p116, %p117
    %p119 = scmp.ne.s32.totalorder %s108, %s109
    %p120 = scmp.eq.s32.totalorder %s16, 0
    %p121 = por %p119, %p120
    %p122 = scmp.ne.s32.totalorder %s108, %s109
    %p123 = scmp.eq.s32.totalorder %s17, 1
    %p124 = por %p122, %p123
    %p126 = scmp.ne.s32.totalorder %s109, %s125
    %p127 = scmp.eq.s32.totalorder %s17, 0
    %p128 = por %p126, %p127
    %s129 = ssub.s32 %s18, %s30
    %s130 = ssub.s32 %s19, %s26
    %s131 = sor.u32 %s129, %s130
    %p132 = scmp.eq.s32.totalorder %s131, 0
    %s134 = sadd.s32 %s133, 1
    %s135 = scalar_select %p132, %s133, %s134
    %p138 = pneg %p132
    %p139 = scmp.eq.s32.totalorder %s11, 1
    %p140 = por %p138, %p139
    %p141 = scmp.ne.s32.totalorder %s133, %s136
    %p142 = scmp.eq.s32.totalorder %s11, 0
    %p143 = por %p141, %p142
    %p144 = scmp.ne.s32.totalorder %s133, %s136
    %p145 = scmp.eq.s32.totalorder %s16, 1
    %p146 = por %p144, %p145
    %p147 = scmp.ne.s32.totalorder %s136, %s137
    %p148 = scmp.eq.s32.totalorder %s16, 0
    %p149 = por %p147, %p148
    %p150 = scmp.ne.s32.totalorder %s136, %s137
    %p151 = scmp.eq.s32.totalorder %s17, 1
    %p152 = por %p150, %p151
    %p154 = scmp.ne.s32.totalorder %s137, %s153
    %p155 = scmp.eq.s32.totalorder %s17, 0
    %p156 = por %p154, %p155
    %p157 = scmp.le.s32.totalorder 1, %s11
    %p158 = scmp.lt.s32.totalorder %s11, 3
    %p159 = pnand %p157, %p158
    %p160 = pneg %p159
    // Predicated region
    $region9: #{weakly_selector_forward.1} parent=5 // pred_check
      _
    $region10: #{weakly_selector_forward.1} parent=5 // pred_check_branch
      %162 = sbr.rel (%p159) target = $region12
    $region11: #{weakly_selector_forward.1} parent=5 // pred_region
      %s163 = ssub.s32 %s11, 1
      // Predicated region
      $region13: #{weakly_selector_forward.1} parent=11 // pred_check
        %p164 = pneg %p44
      $region14: #{weakly_selector_forward.1} parent=11 // pred_check_branch
        %166 = sbr.rel (%p164) target = $region16
      $region15: #{weakly_selector_forward.1} parent=11 // pred_region
        _
      $region16: #{weakly_selector_forward.1} parent=11 // pred_fallthru
        _
      // Predicated region
      $region17: #{weakly_selector_forward.1} parent=11 // pred_check
        %p167 = pneg %p65
      $region18: #{weakly_selector_forward.1} parent=11 // pred_check_branch
        %169 = sbr.rel (%p167) target = $region20
      $region19: #{weakly_selector_forward.1} parent=11 // pred_region
        _
      $region20: #{weakly_selector_forward.1} parent=11 // pred_fallthru
        _
    $region12: #{weakly_selector_forward.1} parent=5 // pred_fallthru
      _
    %p170 = scmp.lt.s32.totalorder %s11, 2
    // Predicated region
    $region21: #{weakly_selector_forward.1} parent=5 // pred_check
      %p171 = pneg %p170
    $region22: #{weakly_selector_forward.1} parent=5 // pred_check_branch
      %173 = sbr.rel (%p171) target = $region24
    $region23: #{weakly_selector_forward.1} parent=5 // pred_region
      // Predicated region
      $region25: #{weakly_selector_forward.1} parent=23 // pred_check
        %p174 = pneg %p87
      $region26: #{weakly_selector_forward.1} parent=23 // pred_check_branch
        %176 = sbr.rel (%p174) target = $region28
      $region27: #{weakly_selector_forward.1} parent=23 // pred_region
        %s177 = smul.u32 2, %s19
        %p178 = scmp.lt.s32.totalorder %s18, 1
        %s179 = scalar_select %p178, %s18, 1
        %p180 = scmp.lt.s32.totalorder %s177, 1
        %s181 = scalar_select %p180, %s177, 1
        %s182 = smul.addr %s179, 8
        %s183 = sadd.s32 %s181, %s182
        %s184 = smul.addr %s183, 8
        %s185 = scalar_lea.vmem %s2, %s184
        %s186 = smul.u32 2, %s19
      $region28: #{weakly_selector_forward.1} parent=23 // pred_fallthru
        _
    $region24: #{weakly_selector_forward.1} parent=5 // pred_fallthru
      _
    %p187 = scmp.le.s32.totalorder 1, %s11
    %p188 = scmp.lt.s32.totalorder %s11, 3
    %p189 = pnand %p187, %p188
    %p190 = pneg %p189
    // Predicated region
    $region29: #{weakly_selector_forward.1} parent=5 // pred_check
      _
    $region30: #{weakly_selector_forward.1} parent=5 // pred_check_branch
      %192 = sbr.rel (%p189) target = $region32
    $region31: #{weakly_selector_forward.1} parent=5 // pred_region
      %s193 = ssub.s32 %s11, 1
      %p194 = pneg %p44
      %p195 = pneg %p41
      %p196 = pneg %p65
      %p197 = pneg %p62
      %s198 = smul.u32 2, %s21
      %p199 = scmp.lt.s32.totalorder %s20, 1
      %s200 = scalar_select %p199, %s20, 1
      %p201 = scmp.lt.s32.totalorder %s198, 1
      %s202 = scalar_select %p201, %s198, 1
      %s203 = smul.addr %s200, 8
      %s204 = sadd.s32 %s202, %s203
      %s205 = smul.addr %s204, 8
      %s206 = scalar_lea.vmem %s2, %s205
      %p207 = pneg %p93
      %p208 = pneg %p90
      %p209 = pneg %p121
      %p210 = pneg %p118
      %s211 = smul.u32 2, %s21
      %p212 = scmp.lt.s32.totalorder %s20, 1
      %s213 = scalar_select %p212, %s20, 1
      %p214 = scmp.lt.s32.totalorder %s211, 1
      %s215 = scalar_select %p214, %s211, 1
      %s216 = smul.addr %s213, 4
      %s217 = sadd.s32 %s215, %s216
      %s218 = smul.addr %s217, 8
      %s219 = scalar_lea.vmem %s3, %s218
      %p220 = pneg %p149
      %p221 = pneg %p146
      %s222 = smul.u32 2, %s21
      %p223 = scmp.lt.s32.totalorder %s20, 1
      %s224 = scalar_select %p223, %s20, 1
      %p225 = scmp.lt.s32.totalorder %s222, 1
      %s226 = scalar_select %p225, %s222, 1
      %s227 = smul.addr %s224, 2
      %s228 = sadd.s32 %s226, %s227
      %s229 = scalar_lea.vmem %s4, %s228
      %s230 = smul.u32 2, %s21
      %p231 = scmp.lt.s32.totalorder %s20, 1
      %s232 = scalar_select %p231, %s20, 1
      %p233 = scmp.lt.s32.totalorder %s230, 1
      %s234 = scalar_select %p233, %s230, 1
      %s235 = smul.addr %s232, 8
      %s236 = sadd.s32 %s234, %s235
      %s237 = smul.addr %s236, 8
      %s238 = scalar_lea.vmem %s2, %s237
      %s239 = smul.u32 2, %s21
      %s240 = smul.u32 2, %s21
      %p241 = scmp.lt.s32.totalorder %s20, 1
      %s242 = scalar_select %p241, %s20, 1
      %p243 = scmp.lt.s32.totalorder %s240, 1
      %s244 = scalar_select %p243, %s240, 1
      %s245 = smul.addr %s242, 4
      %s246 = sadd.s32 %s244, %s245
      %s247 = smul.addr %s246, 8
      %s248 = scalar_lea.vmem %s3, %s247
      %s249 = smul.u32 2, %s21
      %s250 = smul.u32 2, %s21
      %p251 = scmp.lt.s32.totalorder %s20, 1
      %s252 = scalar_select %p251, %s20, 1
      %p253 = scmp.lt.s32.totalorder %s250, 1
      %s254 = scalar_select %p253, %s250, 1
      %s255 = smul.addr %s252, 2
      %s256 = sadd.s32 %s254, %s255
      %s257 = scalar_lea.vmem %s4, %s256
      %s258 = smul.u32 2, %s21
      %v259 = vld [vmem:[%s0] sm:$0xff]
      %v260 = vld [vmem:[%s0 + $0x8] sm:$0xff]
      %v261 = vld [vmem:[%s238] sm:$0xff]
      %v262 = vld [vmem:[%s238 + $0x8] sm:$0xff]
      %v263 = vld [vmem:[%s238 + $0x10] sm:$0xff]
      %v264 = vld [vmem:[%s238 + $0x18] sm:$0xff]
      %v265 = vld [vmem:[%s238 + $0x20] sm:$0xff]
      %v266 = vld [vmem:[%s238 + $0x28] sm:$0xff]
      %v267 = vld [vmem:[%s238 + $0x30] sm:$0xff]
      %v268 = vld [vmem:[%s238 + $0x38] sm:$0xff]
      %v269 = vld [vmem:[%s1] sm:$0xff]
      %v270 = vld [vmem:[%s1 + $0x8] sm:$0xff]
      %272 = vset.pattern.permute.xlu0 0
      %273 = vperm.xlu0 %272, %v269
      %v274 = vpop.permute.xlu0 %273
      %277 = vset.pattern.permute.xlu0 0
      %278 = vperm.xlu0 %277, %v270
      %v279 = vpop.permute.xlu0 %278
      %vm281 = vcmask 261120
      %v283 = vsel %vm281, %v259, 0
      %v286 = vsel %vm281, %v260, 0
      %288 = vmatpush.msra.mxu0 0.0
      %289 = vmatpush.msra.mxu0 0.0
      %290 = vmatpush.msra.mxu0 0.0
      %291 = vmatpush.msra.mxu0 0.0
      %292 = vmatpush.msra.mxu0 0.0
      %293 = vmatpush.msra.mxu0 0.0
      %294 = vmatpush.msra.mxu0 0.0
      %295 = vmatpush.msra.mxu0 0.0
      %296 = vmatpush.msra.mxu0 0.0
      %297 = vmatpush.msra.mxu0 0.0
      %298 = vmatpush.msra.mxu0 0.0
      %299 = vmatpush.msra.mxu0 0.0
      %300 = vmatpush.msra.mxu0 %v267
      %301 = vmatpush.msra.mxu0 %v265
      %302 = vmatpush.msra.mxu0 %v263
      %303 = vmatpush.msra.mxu0 %v261
      %304 = vmatmul.f32.gmra.mxu0 %v283
      %v305 = vpop.f32.mrf.mxu0
      %v306 = vadd.f32 %v274, %v305
      %307 = vmatmul.f32.gmra.mxu0 %v286
      %v308 = vpop.f32.mrf.mxu0
      %v309 = vadd.f32 %v279, %v308
      %310 = vdwg.mxu0
      %311 = vmatpush.msra.mxu0 0.0
      %312 = vmatpush.msra.mxu0 0.0
      %313 = vmatpush.msra.mxu0 0.0
      %314 = vmatpush.msra.mxu0 0.0
      %315 = vmatpush.msra.mxu0 0.0
      %316 = vmatpush.msra.mxu0 0.0
      %317 = vmatpush.msra.mxu0 0.0
      %318 = vmatpush.msra.mxu0 0.0
      %319 = vmatpush.msra.mxu0 0.0
      %320 = vmatpush.msra.mxu0 0.0
      %321 = vmatpush.msra.mxu0 0.0
      %322 = vmatpush.msra.mxu0 0.0
      %323 = vmatpush.msra.mxu0 %v268
      %324 = vmatpush.msra.mxu0 %v266
      %325 = vmatpush.msra.mxu0 %v264
      %326 = vmatpush.msra.mxu0 %v262
      %327 = vmatmul.f32.gmra.mxu0 %v283
      %v328 = vpop.f32.mrf.mxu0
      %v329 = vadd.f32 %v274, %v328
      %330 = vmatmul.f32.gmra.mxu0 %v286
      %v331 = vpop.f32.mrf.mxu0
      %v332 = vadd.f32 %v279, %v331
      %333 = vdwg.mxu0
      %v334 = vmax.f32 %v306, %v309
      %v335 = vrot.slane %v334, 4
      %v336 = vmax.f32 %v334, %v335
      %v337 = vrot.slane %v336, 2
      %v338 = vmax.f32 %v336, %v337
      %v339 = vrot.slane %v338, 1
      %v340 = vmax.f32 %v338, %v339
      %v341 = vmax.f32 %v329, %v332
      %v342 = vrot.slane %v341, 4
      %v343 = vmax.f32 %v341, %v342
      %v344 = vrot.slane %v343, 2
      %v345 = vmax.f32 %v343, %v344
      %v346 = vrot.slane %v345, 1
      %v347 = vmax.f32 %v345, %v346
      %v348 = vsub.f32 %v306, %v340
      %v349 = vsub.f32 %v329, %v347
      %v350 = vsub.f32 %v309, %v340
      %v351 = vsub.f32 %v332, %v347
      %v352 = vmul.f32 %v348, 1.442695
      %v353 = vpow.pop %v352
      %v354 = vmul.f32 %v349, 1.442695
      %v355 = vpow.pop %v354
      %v356 = vmul.f32 %v350, 1.442695
      %v357 = vpow.pop %v356
      %v358 = vmul.f32 %v351, 1.442695
      %v359 = vpow.pop %v358
      %v360 = vadd.f32 %v353, %v357
      %v361 = vrot.slane %v360, 4
      %v362 = vadd.f32 %v360, %v361
      %v363 = vrot.slane %v362, 2
      %v364 = vadd.f32 %v362, %v363
      %v365 = vrot.slane %v364, 1
      %v366 = vadd.f32 %v364, %v365
      %v367 = vadd.f32 %v355, %v359
      %v368 = vrot.slane %v367, 4
      %v369 = vadd.f32 %v367, %v368
      %v370 = vrot.slane %v369, 2
      %v371 = vadd.f32 %v369, %v370
      %v372 = vrot.slane %v371, 1
      %v373 = vadd.f32 %v371, %v372
      %374 = vst [vmem:[%s248] sm:$0xff] %v306
      %375 = vst [vmem:[%s248 + $0x8] sm:$0xff] %v329
      %376 = vst [vmem:[%s248 + $0x10] sm:$0xff] %v309
      %377 = vst [vmem:[%s248 + $0x18] sm:$0xff] %v332
      %v380 = vrot.slane %v373, 7
      %vm381 = vcmask 1040384
      %v382 = vsel %vm381, %v366, %v380
      %v384 = vlaneseq
      %vm385 = vcmp.ge.s32.totalorder %v384, 0
      %vm386 = vcmp.lt.s32.totalorder %v384, 256
      %vm387 = vmand %vm385, %vm386
      %388 = vst.msk [vmem:[%s257] sm:$0x3] %vm387, %v382
      %s389 = smul.u32 2, %s21
      %p390 = scmp.lt.s32.totalorder %s20, 1
      %s391 = scalar_select %p390, %s20, 1
      %p392 = scmp.lt.s32.totalorder %s389, 1
      %s393 = scalar_select %p392, %s389, 1
      %s394 = smul.addr %s391, 4
      %s395 = sadd.s32 %s393, %s394
      %s396 = smul.addr %s395, 8
      %s397 = scalar_lea.vmem %s3, %s396
      %s398 = smul.u32 2, %s21
      %p399 = scmp.lt.s32.totalorder %s20, 1
      %s400 = scalar_select %p399, %s20, 1
      %p401 = scmp.lt.s32.totalorder %s398, 1
      %s402 = scalar_select %p401, %s398, 1
      %s403 = smul.addr %s400, 2
      %s404 = sadd.s32 %s402, %s403
      %s405 = scalar_lea.vmem %s4, %s404
      // Predicated region
      $region33: #{weakly_selector_forward.1} parent=31 // pred_check
        %p406 = pneg %p118
      $region34: #{weakly_selector_forward.1} parent=31 // pred_check_branch
        %408 = sbr.rel (%p406) target = $region36
      $region35: #{weakly_selector_forward.1} parent=31 // pred_region
        %s409 = smul.u32 2, %s21
      $region36: #{weakly_selector_forward.1} parent=31 // pred_fallthru
        _
      // Predicated region
      $region37: #{weakly_selector_forward.1} parent=31 // pred_check
        %p410 = pneg %p146
      $region38: #{weakly_selector_forward.1} parent=31 // pred_check_branch
        %412 = sbr.rel (%p410) target = $region40
      $region39: #{weakly_selector_forward.1} parent=31 // pred_region
        %s413 = smul.u32 2, %s21
      $region40: #{weakly_selector_forward.1} parent=31 // pred_fallthru
        _
    $region32: #{weakly_selector_forward.1} parent=5 // pred_fallthru
      _
    %p414 = scmp.le.s32.totalorder 2, %s11
    // Predicated region
    $region41: #{weakly_selector_forward.1} parent=5 // pred_check
      %p415 = pneg %p414
    $region42: #{weakly_selector_forward.1} parent=5 // pred_check_branch
      %417 = sbr.rel (%p415) target = $region44
    $region43: #{weakly_selector_forward.1} parent=5 // pred_region
      %s418 = ssub.s32 %s11, 2
      // Predicated region
      $region45: #{weakly_selector_forward.1} parent=43 // pred_check
        %p419 = pneg %p124
      $region46: #{weakly_selector_forward.1} parent=43 // pred_check_branch
        %421 = sbr.rel (%p419) target = $region48
      $region47: #{weakly_selector_forward.1} parent=43 // pred_region
        %s422 = smul.u32 2, %s23
        %p423 = scmp.lt.s32.totalorder %s22, 1
        %s424 = scalar_select %p423, %s22, 1
        %p425 = scmp.lt.s32.totalorder %s422, 1
        %s426 = scalar_select %p425, %s422, 1
        %s427 = smul.addr %s424, 4
        %s428 = sadd.s32 %s426, %s427
        %s429 = smul.addr %s428, 8
        %s430 = scalar_lea.vmem %s3, %s429
      $region48: #{weakly_selector_forward.1} parent=43 // pred_fallthru
        _
      // Predicated region
      $region49: #{weakly_selector_forward.1} parent=43 // pred_check
        %p431 = pneg %p152
      $region50: #{weakly_selector_forward.1} parent=43 // pred_check_branch
        %433 = sbr.rel (%p431) target = $region52
      $region51: #{weakly_selector_forward.1} parent=43 // pred_region
        %s434 = smul.u32 2, %s23
        %p435 = scmp.lt.s32.totalorder %s22, 1
        %s436 = scalar_select %p435, %s22, 1
        %p437 = scmp.lt.s32.totalorder %s434, 1
        %s438 = scalar_select %p437, %s434, 1
        %s439 = smul.addr %s436, 2
        %s440 = sadd.s32 %s438, %s439
        %s441 = scalar_lea.vmem %s4, %s440
      $region52: #{weakly_selector_forward.1} parent=43 // pred_fallthru
        _
    $region44: #{weakly_selector_forward.1} parent=5 // pred_fallthru
      _
  $region6: #{weakly_selector_forward.1} parent=0 // loop_footer
    %s15 = sadd.s32 1, %s11
  $region7: #{weakly_selector_forward.1} parent=0 // loop_footer_branch
    %10 = sbr.rel target = $region3
  $region8: #{weakly_selector_forward.1} parent=0 // loop_exit
    _

</llo_original>
